<compile_context>
chip_gen: v5e
topology: v5e:2x2
jax: 0.10.0
libtpu: 0.0.40
codegen_flags: <defaults>
</compile_context>

<pallas_src>
import jax
import jax.numpy as jnp
from jax.experimental import pallas as pl
from jax.experimental.pallas import tpu as pltpu


def ca_kernel(x_ref, phw_ref, eh_ref, ew_ref, w1_ref, bnb_ref, w2_ref, out_ref):
    """One grid step: `bt` images laid out as a (bt*C, H*W) lane-dense slab."""
    xb = x_ref[...].astype(jnp.float32)                                     # (bt*C, HW)

    # Fused directional average pools: columns [:H] = mean over W per row h,
    # columns [H:] = mean over H per column w.  Single matmul, K = HW.
    pooled = jnp.dot(xb, phw_ref[...], preferred_element_type=jnp.float32)  # (bt*C, H+W)

    # conv1 (1x1, no bias) with the inference-BN scale folded into its rows;
    # block-diagonal across the bt images of this block.  conv/BN/h_swish are
    # per-position along the fused (H+W) axis, so one matmul / one chain is exact.
    y1 = jnp.dot(w1_ref[...], pooled, preferred_element_type=jnp.float32)   # (bt*mip, H+W)
    y1 = y1 + bnb_ref[...]
    y1 = y1 * (jnp.clip(y1 + 3.0, 0.0, 6.0) * (1.0 / 6.0))                  # h_swish

    # conv2 (shared weights, block-diagonal) + sigmoid on the fused axis.
    a = jax.nn.sigmoid(
        jnp.dot(w2_ref[...], y1, preferred_element_type=jnp.float32))       # (bt*C, H+W)

    # Expand gates straight into the flat (H*W) lane layout with zero-padded
    # one-hot expansion matrices (no lane slice of `a`, no relayouts; exact).
    gate_h = jnp.dot(a, eh_ref[...], preferred_element_type=jnp.float32)    # (bt*C, HW)
    gate_w = jnp.dot(a, ew_ref[...], preferred_element_type=jnp.float32)    # (bt*C, HW)

    # out = identity * a_w * a_h (same multiply order as the PyTorch module).
    # TODO(synk): on v6e/v7x a bf16 final-multiply/store path for bf16 inputs
    # would halve the dominant slab traffic (skip on v5e: no bf16 VALU).
    out_ref[...] = (xb * gate_w * gate_h).astype(out_ref.dtype)


def _vmem_limit_bytes():
    """Explicit scoped-VMEM limit: 3/4 of physical, conservative fallback."""
    cap = 64 << 20  # v7x per-TensorCore physical VMEM (smallest of the fleet)
    try:
        info = pltpu.get_tpu_info()
        cap = getattr(info, "vmem_capacity_bytes", cap) or cap
    except Exception:
        pass
    return min(int(cap) * 3 // 4, 96 << 20)


def _pick_block_batches(B, C, HW, itemsize, target_bytes):
    """Largest divisor `bt` of B such that:
      * the (bt*C, HW) x-slab fits `target_bytes`,
      * bt*C <= 256 (block-diagonal conv weights stay ~one MXU K-tile; their
        VMEM footprint grows as bt^2),
      * >= 4 grid steps remain when B allows it (>= 2 per TC on dual-core
        chips so each core keeps its pipeline double-buffered),
      * the sublane dim bt*C is a multiple of 8 (or the block is full-array).
    """
    per_image = C * HW * itemsize
    min_steps = 4 if B >= 4 else (2 if B >= 2 else 1)
    bt = 1
    for cand in range(1, B + 1):
        if B % cand:
            continue
        if cand * per_image > target_bytes:
            break
        if cand * C > 256:
            break
        if cand < B and (cand * C) % 8 != 0:
            continue
        if B // cand >= min_steps:
            bt = cand
    if (bt * C) % 8 != 0 and bt != B:
        bt = B  # full-array block is always a legal BlockSpec
    return bt


def ca_forward(x, w1, bn_scale, bn_bias, w2):
    B, C, H, W = x.shape
    mip = w1.shape[0]
    Cout = w2.shape[0]
    assert Cout == C, "CA forward requires out_channel == in_channel"
    HW = H * W
    L = H + W
    dtype = x.dtype
    f32 = jnp.float32
    itemsize = jnp.dtype(dtype).itemsize

    # TODO(synk): if HW < 128 for a deployment, fold a factor of C into the
    # lane axis in this reshape to avoid masked partial stores.
    vmem_limit = _vmem_limit_bytes()
    target_bytes = min(4 << 20, vmem_limit // 12)   # ~2x in + 2x out + 3 f32 temps
    bt = _pick_block_batches(B, C, HW, itemsize, target_bytes)
    grid = (B // bt,)

    # Constant pooling / expansion matrices (shared across all grid steps).
    l = jnp.arange(HW)
    col_h = jnp.arange(H)
    col_w = jnp.arange(W)
    ph = (l[:, None] // W == col_h[None, :]).astype(f32) / W          # (HW, H)
    pw = (l[:, None] % W == col_w[None, :]).astype(f32) / H           # (HW, W)
    phw = jnp.concatenate([ph, pw], axis=1)                           # (HW, H+W)

    eh = (l[None, :] // W == col_h[:, None]).astype(f32)              # (H, HW)
    ew = (l[None, :] % W == col_w[:, None]).astype(f32)               # (W, HW)
    eh_full = jnp.concatenate([eh, jnp.zeros((W, HW), f32)], axis=0)  # (H+W, HW)
    ew_full = jnp.concatenate([jnp.zeros((H, HW), f32), ew], axis=0)  # (H+W, HW)

    # Block-diagonal conv weights (BN scale folded into conv1) and tiled bias
    # so one 2-D matmul handles every image in a grid step.
    eye_bt = jnp.eye(bt, dtype=f32)
    w1_scaled = w1.astype(f32) * bn_scale.astype(f32)  # (mip, C) row-scaled
    w1_bd = jnp.kron(eye_bt, w1_scaled)                # (bt*mip, bt*C)
    w2_bd = jnp.kron(eye_bt, w2.astype(f32))           # (bt*C,   bt*mip)
    bnb = jnp.tile(bn_bias.astype(f32), (bt, 1))       # (bt*mip, 1)

    x2 = x.reshape(B * C, HW)                          # free (row-major contiguous)

    const_bytes = (phw.size + eh_full.size + ew_full.size
                   + w1_bd.size + w2_bd.size + bnb.size) * 4
    cost = pl.CostEstimate(
        flops=int(2 * B * C * HW * L                   # fused pooling
                  + 4 * B * mip * C * L                # conv1 + conv2
                  + 4 * B * C * HW * L                 # gate expansions
                  + 5 * B * C * HW),                   # h_swish / final multiplies
        transcendentals=int(B * C * L),                # sigmoid
        bytes_accessed=int(2 * B * C * HW * itemsize + const_bytes),
    )

    out2 = pl.pallas_call(
        ca_kernel,
        out_shape=jax.ShapeDtypeStruct((B * C, HW), dtype),
        grid=grid,
        in_specs=[
            pl.BlockSpec((bt * C, HW), lambda i: (i, 0)),        # x slab
            pl.BlockSpec((HW, L), lambda i: (0, 0)),             # fused pool matrix
            pl.BlockSpec((L, HW), lambda i: (0, 0)),             # expand-H (padded)
            pl.BlockSpec((L, HW), lambda i: (0, 0)),             # expand-W (padded)
            pl.BlockSpec((bt * mip, bt * C), lambda i: (0, 0)),  # conv1 (BN-folded, block-diag)
            pl.BlockSpec((bt * mip, 1), lambda i: (0, 0)),       # BN bias
            pl.BlockSpec((bt * C, bt * mip), lambda i: (0, 0)),  # conv2 (block-diag)
        ],
        out_specs=pl.BlockSpec((bt * C, HW), lambda i: (i, 0)),
        compiler_params=pltpu.CompilerParams(
            dimension_semantics=("parallel",),
            vmem_limit_bytes=vmem_limit),
        cost_estimate=cost,
    )(x2, phw, eh_full, ew_full, w1_bd, bnb, w2_bd)

    return out2.reshape(B, C, H, W)


def ca_reference(x, w1, bn_scale, bn_bias, w2):
    # Pure-JAX reference mirroring the PyTorch forward (BN in inference mode).
    pool_h = jnp.mean(x, axis=3)                    # (B, C, H)
    pool_w = jnp.mean(x, axis=2)                    # (B, C, W)
    y = jnp.concatenate([pool_h, pool_w], axis=2)   # (B, C, H+W)
    y1 = jnp.einsum('mc,bcl->bml', w1, y)
    y1 = y1 * bn_scale[None, :, :] + bn_bias[None, :, :]
    y1 = y1 * (jnp.clip(y1 + 3.0, 0.0, 6.0) / 6.0)
    H = x.shape[2]
    yh, yw = y1[:, :, :H], y1[:, :, H:]
    a_h = jax.nn.sigmoid(jnp.einsum('om,bml->bol', w2, yh))   # (B, Cout, H)
    a_w = jax.nn.sigmoid(jnp.einsum('om,bml->bol', w2, yw))   # (B, Cout, W)
    return x * a_w[:, :, None, :] * a_h[:, :, :, None]


if __name__ == "__main__":
    B, C, H, W = 2, 32, 16, 16
    ratio = 8
    mip = max(8, C // ratio)        # 8
    Cout = C                        # out = identity * gates requires Cout == C

    key = jax.random.PRNGKey(0)
    kx, k1, k2 = jax.random.split(key, 3)
    x = jax.random.normal(kx, (B, C, H, W), dtype=jnp.float32)
    # 1x1 conv weights as 2-D matrices, deterministic init
    w1 = jax.random.normal(k1, (mip, C), dtype=jnp.float32) * 0.1
    w2 = jax.random.normal(k2, (Cout, mip), dtype=jnp.float32) * 0.1

    # BatchNorm2d default params (gamma=1, beta=0, running stats 0/1) folded
    # into per-channel scale/bias (inference-mode BN).
    eps = 1e-5
    gamma = jnp.ones((mip,), jnp.float32)
    beta = jnp.zeros((mip,), jnp.float32)
    rmean = jnp.zeros((mip,), jnp.float32)
    rvar = jnp.ones((mip,), jnp.float32)
    bn_scale = (gamma / jnp.sqrt(rvar + eps)).reshape(mip, 1)
    bn_bias = (beta - rmean * gamma / jnp.sqrt(rvar + eps)).reshape(mip, 1)

    out = ca_forward(x, w1, bn_scale, bn_bias, w2)
    out = jax.block_until_ready(out)

    ref = ca_reference(x, w1, bn_scale, bn_bias, w2)
    assert out.shape == (B, Cout, H, W)
    assert jnp.allclose(out, ref, atol=1e-4, rtol=1e-4), "mismatch vs reference"

    print("KERNEL_OK")
</pallas_src>

<mosaic_0001>
module attributes {stable_mosaic.version = 11 : i64} {
  func.func @ca_kernel(%arg0: i32, %arg1: memref<32x256xf32, #tpu.memory_space<vmem>>, %arg2: memref<256x32xf32, #tpu.memory_space<vmem>>, %arg3: memref<32x256xf32, #tpu.memory_space<vmem>>, %arg4: memref<32x256xf32, #tpu.memory_space<vmem>>, %arg5: memref<8x32xf32, #tpu.memory_space<vmem>>, %arg6: memref<8x1xf32, #tpu.memory_space<vmem>>, %arg7: memref<32x8xf32, #tpu.memory_space<vmem>>, %arg8: memref<32x256xf32, #tpu.memory_space<vmem>>) attributes {dimension_semantics = [#tpu.dimension_semantics<parallel>], iteration_bounds = array<i64: 2>, scalar_prefetch = 0 : i64, scratch_operands = 0 : i64, tpu.core_type = #tpu.core_type<tc>, window_params = [{transform_indices = @transform_0, window_bounds = array<i64: 32, 256>}, {pipeline_mode = #tpu.pipeline_mode<synchronous>, transform_indices = @transform_1, window_bounds = array<i64: 256, 32>}, {pipeline_mode = #tpu.pipeline_mode<synchronous>, transform_indices = @transform_2, window_bounds = array<i64: 32, 256>}, {pipeline_mode = #tpu.pipeline_mode<synchronous>, transform_indices = @transform_3, window_bounds = array<i64: 32, 256>}, {pipeline_mode = #tpu.pipeline_mode<synchronous>, transform_indices = @transform_4, window_bounds = array<i64: 8, 32>}, {pipeline_mode = #tpu.pipeline_mode<synchronous>, transform_indices = @transform_5, window_bounds = array<i64: 8, 1>}, {pipeline_mode = #tpu.pipeline_mode<synchronous>, transform_indices = @transform_6, window_bounds = array<i64: 32, 8>}, {transform_indices = @transform_7, window_bounds = array<i64: 32, 256>}]} {
    %c0 = arith.constant 0 : index
    %c0_0 = arith.constant 0 : index
    %0 = vector.load %arg1[%c0, %c0_0] : memref<32x256xf32, #tpu.memory_space<vmem>>, vector<32x256xf32>
    %c0_1 = arith.constant 0 : index
    %c0_2 = arith.constant 0 : index
    %1 = vector.load %arg2[%c0_1, %c0_2] : memref<256x32xf32, #tpu.memory_space<vmem>>, vector<256x32xf32>
    %cst = arith.constant dense<0.000000e+00> : vector<32x32xf32>
    %2 = tpu.matmul %0, %1, %cst {dimension_numbers = #tpu.dot_dimension_numbers<[1], [0], [0], [1], [0, 0, 1, 1], [], []>} : vector<32x256xf32>, vector<256x32xf32>, vector<32x32xf32> -> vector<32x32xf32>
    %c0_3 = arith.constant 0 : index
    %c0_4 = arith.constant 0 : index
    %3 = vector.load %arg5[%c0_3, %c0_4] : memref<8x32xf32, #tpu.memory_space<vmem>>, vector<8x32xf32>
    %cst_5 = arith.constant dense<0.000000e+00> : vector<8x32xf32>
    %4 = tpu.matmul %3, %2, %cst_5 {dimension_numbers = #tpu.dot_dimension_numbers<[1], [0], [0], [1], [0, 0, 1, 1], [], []>} : vector<8x32xf32>, vector<32x32xf32>, vector<8x32xf32> -> vector<8x32xf32>
    %c0_6 = arith.constant 0 : index
    %c0_7 = arith.constant 0 : index
    %5 = vector.load %arg6[%c0_6, %c0_7] : memref<8x1xf32, #tpu.memory_space<vmem>>, vector<8x1xf32>
    %6 = vector.broadcast %5 : vector<8x1xf32> to vector<8x32xf32>
    %7 = arith.addf %4, %6 : vector<8x32xf32>
    %cst_8 = arith.constant 3.000000e+00 : f32
    %8 = vector.broadcast %cst_8 : f32 to vector<8x32xf32>
    %9 = arith.addf %7, %8 : vector<8x32xf32>
    %cst_9 = arith.constant 0.000000e+00 : f32
    %cst_10 = arith.constant 6.000000e+00 : f32
    %10 = vector.broadcast %cst_9 : f32 to vector<8x32xf32>
    %11 = arith.maximumf %10, %9 : vector<8x32xf32>
    %12 = vector.broadcast %cst_10 : f32 to vector<8x32xf32>
    %13 = arith.minimumf %12, %11 : vector<8x32xf32>
    %cst_11 = arith.constant 0.166666672 : f32
    %14 = vector.broadcast %cst_11 : f32 to vector<8x32xf32>
    %15 = arith.mulf %13, %14 : vector<8x32xf32>
    %16 = arith.mulf %7, %15 : vector<8x32xf32>
    %c0_12 = arith.constant 0 : index
    %c0_13 = arith.constant 0 : index
    %17 = vector.load %arg7[%c0_12, %c0_13] : memref<32x8xf32, #tpu.memory_space<vmem>>, vector<32x8xf32>
    %cst_14 = arith.constant dense<0.000000e+00> : vector<32x32xf32>
    %18 = tpu.matmul %17, %16, %cst_14 {dimension_numbers = #tpu.dot_dimension_numbers<[1], [0], [0], [1], [0, 0, 1, 1], [], []>} : vector<32x8xf32>, vector<8x32xf32>, vector<32x32xf32> -> vector<32x32xf32>
    %19 = arith.negf %18 : vector<32x32xf32>
    %20 = math.exp %19 : vector<32x32xf32>
    %cst_15 = arith.constant 1.000000e+00 : f32
    %21 = vector.broadcast %cst_15 : f32 to vector<32x32xf32>
    %22 = arith.addf %21, %20 : vector<32x32xf32>
    %23 = arith.divf %21, %22 : vector<32x32xf32>
    %c0_16 = arith.constant 0 : index
    %c0_17 = arith.constant 0 : index
    %24 = vector.load %arg3[%c0_16, %c0_17] : memref<32x256xf32, #tpu.memory_space<vmem>>, vector<32x256xf32>
    %cst_18 = arith.constant dense<0.000000e+00> : vector<32x256xf32>
    %25 = tpu.matmul %23, %24, %cst_18 {dimension_numbers = #tpu.dot_dimension_numbers<[1], [0], [0], [1], [0, 0, 1, 1], [], []>} : vector<32x32xf32>, vector<32x256xf32>, vector<32x256xf32> -> vector<32x256xf32>
    %c0_19 = arith.constant 0 : index
    %c0_20 = arith.constant 0 : index
    %26 = vector.load %arg4[%c0_19, %c0_20] : memref<32x256xf32, #tpu.memory_space<vmem>>, vector<32x256xf32>
    %cst_21 = arith.constant dense<0.000000e+00> : vector<32x256xf32>
    %27 = tpu.matmul %23, %26, %cst_21 {dimension_numbers = #tpu.dot_dimension_numbers<[1], [0], [0], [1], [0, 0, 1, 1], [], []>} : vector<32x32xf32>, vector<32x256xf32>, vector<32x256xf32> -> vector<32x256xf32>
    %28 = arith.mulf %0, %27 : vector<32x256xf32>
    %29 = arith.mulf %28, %25 : vector<32x256xf32>
    %c0_22 = arith.constant 0 : index
    %c0_23 = arith.constant 0 : index
    %30 = vector.load %arg8[%c0_22, %c0_23] : memref<32x256xf32, #tpu.memory_space<vmem>>, vector<32x256xf32>
    tpu.vector_store %arg8[%c0_22, %c0_23], %29 {strides = array<i32>} : memref<32x256xf32, #tpu.memory_space<vmem>>, vector<32x256xf32>,
    return
  }
  func.func @transform_0(%arg0: i32) -> (i32, i32) {
    %c0_i32 = arith.constant 0 : i32
    %c0_i32_0 = arith.constant 0 : i32
    return %arg0, %c0_i32 : i32, i32
  }
  func.func @transform_1(%arg0: i32) -> (i32, i32) {
    %c0_i32 = arith.constant 0 : i32
    %c0_i32_0 = arith.constant 0 : i32
    %c0_i32_1 = arith.constant 0 : i32
    return %c0_i32, %c0_i32_0 : i32, i32
  }
  func.func @transform_2(%arg0: i32) -> (i32, i32) {
    %c0_i32 = arith.constant 0 : i32
    %c0_i32_0 = arith.constant 0 : i32
    %c0_i32_1 = arith.constant 0 : i32
    return %c0_i32, %c0_i32_0 : i32, i32
  }
  func.func @transform_3(%arg0: i32) -> (i32, i32) {
    %c0_i32 = arith.constant 0 : i32
    %c0_i32_0 = arith.constant 0 : i32
    %c0_i32_1 = arith.constant 0 : i32
    return %c0_i32, %c0_i32_0 : i32, i32
  }
  func.func @transform_4(%arg0: i32) -> (i32, i32) {
    %c0_i32 = arith.constant 0 : i32
    %c0_i32_0 = arith.constant 0 : i32
    %c0_i32_1 = arith.constant 0 : i32
    return %c0_i32, %c0_i32_0 : i32, i32
  }
  func.func @transform_5(%arg0: i32) -> (i32, i32) {
    %c0_i32 = arith.constant 0 : i32
    %c0_i32_0 = arith.constant 0 : i32
    %c0_i32_1 = arith.constant 0 : i32
    return %c0_i32, %c0_i32_0 : i32, i32
  }
  func.func @transform_6(%arg0: i32) -> (i32, i32) {
    %c0_i32 = arith.constant 0 : i32
    %c0_i32_0 = arith.constant 0 : i32
    %c0_i32_1 = arith.constant 0 : i32
    return %c0_i32, %c0_i32_0 : i32, i32
  }
  func.func @transform_7(%arg0: i32) -> (i32, i32) {
    %c0_i32 = arith.constant 0 : i32
    %c0_i32_0 = arith.constant 0 : i32
    return %arg0, %c0_i32 : i32, i32
  }
}

</mosaic_0001>

<llo_original>
// kernel: tpu_custom_call.1
$region0: #{tpu_custom_call.1}
  #allocation0 [shape = 'u32[]', space=smem, size = 0x4, offset = 0x4, fixed_abs, tag = 'smem constant byte address 0x4 - core index']
  #allocation1 [shape = 'u32[72,128]{1,0:T(1,128)}', space=vmem, size = 0x9000, scoped, tag = 'internal scratch']
  %s0 = inlined_call_operand.vmem [shape: f32[64,256], index: 0, kind: input, shape index: {}]
  %s1 = inlined_call_operand.vmem [shape: f32[256,32], index: 1, kind: input, shape index: {}]
  %s2 = inlined_call_operand.vmem [shape: f32[32,256], index: 2, kind: input, shape index: {}]
  %s3 = inlined_call_operand.vmem [shape: f32[32,256], index: 3, kind: input, shape index: {}]
  %s4 = inlined_call_operand.vmem [shape: f32[8,32], index: 4, kind: input, shape index: {}]
  %s5 = inlined_call_operand.vmem [shape: f32[8,1], index: 5, kind: input, shape index: {}]
  %s6 = inlined_call_operand.vmem [shape: f32[32,8], index: 6, kind: input, shape index: {}]
  %s7 = inlined_call_operand.hbm [shape: f32[64,256], index: 7, kind: output, shape index: {}]
  %s8 = sld [smem:[#allocation0]]
  $region61: #{tpu_custom_call.1} parent=0
    _
  %s10 = ssub.s32 1, %s8
  %s11 = scalar_select 0, %s10, %s8
  $region1: #{tpu_custom_call.1} parent=0
    #allocation2 [shape = 'u8[65536]{0}', space=vmem, size = 0x10000, scoped, tag = 'output window, operand 0']
    #allocation3 [shape = 's32[2]{0}', space=sflag, size = 0x8, scoped, tag = 'scoped memory for tpu_custom_call.1']
    %12 = vsyncpa [#allocation3], 0
    %s13 = scalar_lea.sflag [#allocation3], 1
    %14 = vsyncpa %s13, 0
    loop: start=0, step=1, limit=4
    $region2: #{tpu_custom_call.1} parent=1 // loop_pre_header
      _
    $region3: #{tpu_custom_call.1} parent=1 // loop_header
      %s16 = sphi 0, %s20
      %p17 = scmp.ge.s32.totalorder %s16, 4
      %s26 = sphi 0, %s28
      %s29 = sphi 0, %s26
      %s30 = sphi 0, %s29
      %s46 = sphi 0, %s30
      %s50 = sphi 0, %s50
      %s52 = sphi 0, %s50
      %s53 = sphi 0, %s52
      %s67 = sphi 0, %s53
      %s71 = sphi 0, %s71
      %s73 = sphi 0, %s71
      %s74 = sphi 0, %s73
      %s88 = sphi 0, %s74
      %s92 = sphi 0, %s92
      %s94 = sphi 0, %s92
      %s95 = sphi 0, %s94
      %s109 = sphi 0, %s95
      %s113 = sphi 0, %s113
      %s115 = sphi 0, %s113
      %s116 = sphi 0, %s115
      %s130 = sphi 0, %s116
      %s134 = sphi 0, %s134
      %s136 = sphi 0, %s134
      %s137 = sphi 0, %s136
      %s151 = sphi 0, %s137
      %s155 = sphi 0, %s155
      %s157 = sphi 0, %s155
      %s158 = sphi 0, %s157
      %s172 = sphi 0, %s158
      %s178 = sphi 0, %s180
      %s181 = sphi 0, %s178
      %s182 = sphi 0, %s181
      %s198 = sphi 0, %s182
    $region4: #{tpu_custom_call.1} parent=1 // loop_header_branch
      %19 = sbr.rel (%p17) target = $region8
    $region5: #{tpu_custom_call.1} parent=1 // loop_body
      %s21 = ssub.s32 %s16, 1
      %s22 = ssub.s32 %s16, 2
      %s23 = sadd.s32 %s16, 1
      %s24 = ssub.s32 %s16, %s23
      %p25 = scmp.eq.s32.totalorder %s24, 0
      %s27 = sadd.s32 %s26, 1
      %s28 = scalar_select %p25, %s26, %s27
      %p31 = pneg %p25
      %p32 = scmp.eq.s32.totalorder %s16, 1
      %p33 = por %p31, %p32
      %p34 = scmp.ne.s32.totalorder %s26, %s29
      %p35 = scmp.eq.s32.totalorder %s16, 0
      %p36 = por %p34, %p35
      %p37 = scmp.ne.s32.totalorder %s26, %s29
      %p38 = scmp.eq.s32.totalorder %s21, 1
      %p39 = por %p37, %p38
      %p40 = scmp.ne.s32.totalorder %s29, %s30
      %p41 = scmp.eq.s32.totalorder %s21, 0
      %p42 = por %p40, %p41
      %p43 = scmp.ne.s32.totalorder %s29, %s30
      %p44 = scmp.eq.s32.totalorder %s22, 1
      %p45 = por %p43, %p44
      %p47 = scmp.ne.s32.totalorder %s30, %s46
      %p48 = scmp.eq.s32.totalorder %s22, 0
      %p49 = por %p47, %p48
      %s51 = sadd.s32 %s50, 1
      %p54 = scmp.eq.s32.totalorder %s16, 1
      %p55 = scmp.ne.s32.totalorder %s50, %s52
      %p56 = scmp.eq.s32.totalorder %s16, 0
      %p57 = por %p55, %p56
      %p58 = scmp.ne.s32.totalorder %s50, %s52
      %p59 = scmp.eq.s32.totalorder %s21, 1
      %p60 = por %p58, %p59
      %p61 = scmp.ne.s32.totalorder %s52, %s53
      %p62 = scmp.eq.s32.totalorder %s21, 0
      %p63 = por %p61, %p62
      %p64 = scmp.ne.s32.totalorder %s52, %s53
      %p65 = scmp.eq.s32.totalorder %s22, 1
      %p66 = por %p64, %p65
      %p68 = scmp.ne.s32.totalorder %s53, %s67
      %p69 = scmp.eq.s32.totalorder %s22, 0
      %p70 = por %p68, %p69
      %s72 = sadd.s32 %s71, 1
      %p75 = scmp.eq.s32.totalorder %s16, 1
      %p76 = scmp.ne.s32.totalorder %s71, %s73
      %p77 = scmp.eq.s32.totalorder %s16, 0
      %p78 = por %p76, %p77
      %p79 = scmp.ne.s32.totalorder %s71, %s73
      %p80 = scmp.eq.s32.totalorder %s21, 1
      %p81 = por %p79, %p80
      %p82 = scmp.ne.s32.totalorder %s73, %s74
      %p83 = scmp.eq.s32.totalorder %s21, 0
      %p84 = por %p82, %p83
      %p85 = scmp.ne.s32.totalorder %s73, %s74
      %p86 = scmp.eq.s32.totalorder %s22, 1
      %p87 = por %p85, %p86
      %p89 = scmp.ne.s32.totalorder %s74, %s88
      %p90 = scmp.eq.s32.totalorder %s22, 0
      %p91 = por %p89, %p90
      %s93 = sadd.s32 %s92, 1
      %p96 = scmp.eq.s32.totalorder %s16, 1
      %p97 = scmp.ne.s32.totalorder %s92, %s94
      %p98 = scmp.eq.s32.totalorder %s16, 0
      %p99 = por %p97, %p98
      %p100 = scmp.ne.s32.totalorder %s92, %s94
      %p101 = scmp.eq.s32.totalorder %s21, 1
      %p102 = por %p100, %p101
      %p103 = scmp.ne.s32.totalorder %s94, %s95
      %p104 = scmp.eq.s32.totalorder %s21, 0
      %p105 = por %p103, %p104
      %p106 = scmp.ne.s32.totalorder %s94, %s95
      %p107 = scmp.eq.s32.totalorder %s22, 1
      %p108 = por %p106, %p107
      %p110 = scmp.ne.s32.totalorder %s95, %s109
      %p111 = scmp.eq.s32.totalorder %s22, 0
      %p112 = por %p110, %p111
      %s114 = sadd.s32 %s113, 1
      %p117 = scmp.eq.s32.totalorder %s16, 1
      %p118 = scmp.ne.s32.totalorder %s113, %s115
      %p119 = scmp.eq.s32.totalorder %s16, 0
      %p120 = por %p118, %p119
      %p121 = scmp.ne.s32.totalorder %s113, %s115
      %p122 = scmp.eq.s32.totalorder %s21, 1
      %p123 = por %p121, %p122
      %p124 = scmp.ne.s32.totalorder %s115, %s116
      %p125 = scmp.eq.s32.totalorder %s21, 0
      %p126 = por %p124, %p125
      %p127 = scmp.ne.s32.totalorder %s115, %s116
      %p128 = scmp.eq.s32.totalorder %s22, 1
      %p129 = por %p127, %p128
      %p131 = scmp.ne.s32.totalorder %s116, %s130
      %p132 = scmp.eq.s32.totalorder %s22, 0
      %p133 = por %p131, %p132
      %s135 = sadd.s32 %s134, 1
      %p138 = scmp.eq.s32.totalorder %s16, 1
      %p139 = scmp.ne.s32.totalorder %s134, %s136
      %p140 = scmp.eq.s32.totalorder %s16, 0
      %p141 = por %p139, %p140
      %p142 = scmp.ne.s32.totalorder %s134, %s136
      %p143 = scmp.eq.s32.totalorder %s21, 1
      %p144 = por %p142, %p143
      %p145 = scmp.ne.s32.totalorder %s136, %s137
      %p146 = scmp.eq.s32.totalorder %s21, 0
      %p147 = por %p145, %p146
      %p148 = scmp.ne.s32.totalorder %s136, %s137
      %p149 = scmp.eq.s32.totalorder %s22, 1
      %p150 = por %p148, %p149
      %p152 = scmp.ne.s32.totalorder %s137, %s151
      %p153 = scmp.eq.s32.totalorder %s22, 0
      %p154 = por %p152, %p153
      %s156 = sadd.s32 %s155, 1
      %p159 = scmp.eq.s32.totalorder %s16, 1
      %p160 = scmp.ne.s32.totalorder %s155, %s157
      %p161 = scmp.eq.s32.totalorder %s16, 0
      %p162 = por %p160, %p161
      %p163 = scmp.ne.s32.totalorder %s155, %s157
      %p164 = scmp.eq.s32.totalorder %s21, 1
      %p165 = por %p163, %p164
      %p166 = scmp.ne.s32.totalorder %s157, %s158
      %p167 = scmp.eq.s32.totalorder %s21, 0
      %p168 = por %p166, %p167
      %p169 = scmp.ne.s32.totalorder %s157, %s158
      %p170 = scmp.eq.s32.totalorder %s22, 1
      %p171 = por %p169, %p170
      %p173 = scmp.ne.s32.totalorder %s158, %s172
      %p174 = scmp.eq.s32.totalorder %s22, 0
      %p175 = por %p173, %p174
      %s176 = ssub.s32 %s16, %s23
      %p177 = scmp.eq.s32.totalorder %s176, 0
      %s179 = sadd.s32 %s178, 1
      %s180 = scalar_select %p177, %s178, %s179
      %p183 = pneg %p177
      %p184 = scmp.eq.s32.totalorder %s16, 1
      %p185 = por %p183, %p184
      %p186 = scmp.ne.s32.totalorder %s178, %s181
      %p187 = scmp.eq.s32.totalorder %s16, 0
      %p188 = por %p186, %p187
      %p189 = scmp.ne.s32.totalorder %s178, %s181
      %p190 = scmp.eq.s32.totalorder %s21, 1
      %p191 = por %p189, %p190
      %p192 = scmp.ne.s32.totalorder %s181, %s182
      %p193 = scmp.eq.s32.totalorder %s21, 0
      %p194 = por %p192, %p193
      %p195 = scmp.ne.s32.totalorder %s181, %s182
      %p196 = scmp.eq.s32.totalorder %s22, 1
      %p197 = por %p195, %p196
      %p199 = scmp.ne.s32.totalorder %s182, %s198
      %p200 = scmp.eq.s32.totalorder %s22, 0
      %p201 = por %p199, %p200
      %p202 = scmp.le.s32.totalorder 1, %s16
      %p203 = scmp.lt.s32.totalorder %s16, 3
      %p204 = pnand %p202, %p203
      %p205 = pneg %p204
      // Predicated region
      $region9: #{tpu_custom_call.1} parent=5 // pred_check
        _
      $region10: #{tpu_custom_call.1} parent=5 // pred_check_branch
        %207 = sbr.rel (%p204) target = $region12
      $region11: #{tpu_custom_call.1} parent=5 // pred_region
        %s208 = ssub.s32 %s16, 1
        // Predicated region
        $region13: #{tpu_custom_call.1} parent=11 // pred_check
          %p209 = pneg %p63
        $region14: #{tpu_custom_call.1} parent=11 // pred_check_branch
          %211 = sbr.rel (%p209) target = $region16
        $region15: #{tpu_custom_call.1} parent=11 // pred_region
          _
        $region16: #{tpu_custom_call.1} parent=11 // pred_fallthru
          _
        // Predicated region
        $region17: #{tpu_custom_call.1} parent=11 // pred_check
          %p212 = pneg %p84
        $region18: #{tpu_custom_call.1} parent=11 // pred_check_branch
          %214 = sbr.rel (%p212) target = $region20
        $region19: #{tpu_custom_call.1} parent=11 // pred_region
          _
        $region20: #{tpu_custom_call.1} parent=11 // pred_fallthru
          _
        // Predicated region
        $region21: #{tpu_custom_call.1} parent=11 // pred_check
          %p215 = pneg %p105
        $region22: #{tpu_custom_call.1} parent=11 // pred_check_branch
          %217 = sbr.rel (%p215) target = $region24
        $region23: #{tpu_custom_call.1} parent=11 // pred_region
          _
        $region24: #{tpu_custom_call.1} parent=11 // pred_fallthru
          _
        // Predicated region
        $region25: #{tpu_custom_call.1} parent=11 // pred_check
          %p218 = pneg %p126
        $region26: #{tpu_custom_call.1} parent=11 // pred_check_branch
          %220 = sbr.rel (%p218) target = $region28
        $region27: #{tpu_custom_call.1} parent=11 // pred_region
          _
        $region28: #{tpu_custom_call.1} parent=11 // pred_fallthru
          _
        // Predicated region
        $region29: #{tpu_custom_call.1} parent=11 // pred_check
          %p221 = pneg %p147
        $region30: #{tpu_custom_call.1} parent=11 // pred_check_branch
          %223 = sbr.rel (%p221) target = $region32
        $region31: #{tpu_custom_call.1} parent=11 // pred_region
          _
        $region32: #{tpu_custom_call.1} parent=11 // pred_fallthru
          _
        // Predicated region
        $region33: #{tpu_custom_call.1} parent=11 // pred_check
          %p224 = pneg %p168
        $region34: #{tpu_custom_call.1} parent=11 // pred_check_branch
          %226 = sbr.rel (%p224) target = $region36
        $region35: #{tpu_custom_call.1} parent=11 // pred_region
          _
        $region36: #{tpu_custom_call.1} parent=11 // pred_fallthru
          _
      $region12: #{tpu_custom_call.1} parent=5 // pred_fallthru
        _
      %p227 = scmp.lt.s32.totalorder %s16, 2
      // Predicated region
      $region37: #{tpu_custom_call.1} parent=5 // pred_check
        %p228 = pneg %p227
      $region38: #{tpu_custom_call.1} parent=5 // pred_check_branch
        %230 = sbr.rel (%p228) target = $region40
      $region39: #{tpu_custom_call.1} parent=5 // pred_region
        // Predicated region
        $region41: #{tpu_custom_call.1} parent=39 // pred_check
          %p231 = pneg %p36
        $region42: #{tpu_custom_call.1} parent=39 // pred_check_branch
          %233 = sbr.rel (%p231) target = $region44
        $region43: #{tpu_custom_call.1} parent=39 // pred_region
          %s234 = smul.u32 4, %s16
          %p235 = scmp.lt.s32.totalorder %s234, 7
          %s236 = scalar_select %p235, %s234, 7
          %s237 = smul.addr %s236, 2
          %s238 = smul.addr %s237, 8
          %s239 = scalar_lea.vmem %s0, %s238
          %s240 = smul.u32 4, %s16
        $region44: #{tpu_custom_call.1} parent=39 // pred_fallthru
          _
      $region40: #{tpu_custom_call.1} parent=5 // pred_fallthru
        _
      %p241 = scmp.le.s32.totalorder 1, %s16
      %p242 = scmp.lt.s32.totalorder %s16, 3
      %p243 = pnand %p241, %p242
      %p244 = pneg %p243
      // Predicated region
      $region45: #{tpu_custom_call.1} parent=5 // pred_check
        _
      $region46: #{tpu_custom_call.1} parent=5 // pred_check_branch
        %246 = sbr.rel (%p243) target = $region48
      $region47: #{tpu_custom_call.1} parent=5 // pred_region
        %s247 = ssub.s32 %s16, 1
        %s248 = smul.u32 4, %s21
        %p249 = scmp.lt.s32.totalorder %s248, 7
        %s250 = scalar_select %p249, %s248, 7
        %s251 = smul.addr %s250, 2
        %s252 = smul.addr %s251, 8
        %s253 = scalar_lea.vmem %s0, %s252
        %p254 = pneg %p42
        %p255 = pneg %p39
        %p256 = pneg %p63
        %p257 = pneg %p60
        %p258 = pneg %p84
        %p259 = pneg %p81
        %p260 = pneg %p105
        %p261 = pneg %p102
        %p262 = pneg %p126
        %p263 = pneg %p123
        %p264 = pneg %p147
        %p265 = pneg %p144
        %p266 = pneg %p168
        %p267 = pneg %p165
        %p268 = pneg %p194
        %p269 = pneg %p191
        %s270 = sand.u32 %s181, 1
        %s271 = scalar_lea.sflag [#allocation3], %s270
        %s272 = sand.u32 %s181, 1
        %s273 = smul.addr %s272, 64
        %s274 = scalar_lea.vmem [#allocation2], %s273
        %s275 = smul.u32 4, %s21
        %p276 = scmp.lt.s32.totalorder %s275, 7
        %s277 = scalar_select %p276, %s275, 7
        %s278 = smul.addr %s277, 2
        %s279 = smul.addr %s278, 8
        %s280 = scalar_lea.vmem %s0, %s279
        %s281 = smul.u32 4, %s21
        %s282 = smul.u32 4, %s21
        %v283 = vld [vmem:[%s280] sm:$0xff]
        %v284 = vld [vmem:[%s280 + $0x8] sm:$0xff]
        %v285 = vld [vmem:[%s280 + $0x10] sm:$0xff]
        %v286 = vld [vmem:[%s280 + $0x18] sm:$0xff]
        %v287 = vld [vmem:[%s280 + $0x20] sm:$0xff]
        %v288 = vld [vmem:[%s280 + $0x28] sm:$0xff]
        %v289 = vld [vmem:[%s280 + $0x30] sm:$0xff]
        %v290 = vld [vmem:[%s280 + $0x38] sm:$0xff]
        %v291 = vld [vmem:[%s1] sm:$0xff]
        %v292 = vld [vmem:[%s1 + $0x8] sm:$0xff]
        %v293 = vld [vmem:[%s1 + $0x10] sm:$0xff]
        %v294 = vld [vmem:[%s1 + $0x18] sm:$0xff]
        %v295 = vld [vmem:[%s1 + $0x20] sm:$0xff]
        %v296 = vld [vmem:[%s1 + $0x28] sm:$0xff]
        %v297 = vld [vmem:[%s1 + $0x30] sm:$0xff]
        %v298 = vld [vmem:[%s1 + $0x38] sm:$0xff]
        %v299 = vld [vmem:[%s1 + $0x40] sm:$0xff]
        %v300 = vld [vmem:[%s1 + $0x48] sm:$0xff]
        %v301 = vld [vmem:[%s1 + $0x50] sm:$0xff]
        %v302 = vld [vmem:[%s1 + $0x58] sm:$0xff]
        %v303 = vld [vmem:[%s1 + $0x60] sm:$0xff]
        %v304 = vld [vmem:[%s1 + $0x68] sm:$0xff]
        %v305 = vld [vmem:[%s1 + $0x70] sm:$0xff]
        %v306 = vld [vmem:[%s1 + $0x78] sm:$0xff]
        %v307 = vld [vmem:[%s1 + $0x80] sm:$0xff]
        %v308 = vld [vmem:[%s1 + $0x88] sm:$0xff]
        %v309 = vld [vmem:[%s1 + $0x90] sm:$0xff]
        %v310 = vld [vmem:[%s1 + $0x98] sm:$0xff]
        %v311 = vld [vmem:[%s1 + $0xa0] sm:$0xff]
        %v312 = vld [vmem:[%s1 + $0xa8] sm:$0xff]
        %v313 = vld [vmem:[%s1 + $0xb0] sm:$0xff]
        %v314 = vld [vmem:[%s1 + $0xb8] sm:$0xff]
        %v315 = vld [vmem:[%s1 + $0xc0] sm:$0xff]
        %v316 = vld [vmem:[%s1 + $0xc8] sm:$0xff]
        %v317 = vld [vmem:[%s1 + $0xd0] sm:$0xff]
        %v318 = vld [vmem:[%s1 + $0xd8] sm:$0xff]
        %v319 = vld [vmem:[%s1 + $0xe0] sm:$0xff]
        %v320 = vld [vmem:[%s1 + $0xe8] sm:$0xff]
        %v321 = vld [vmem:[%s1 + $0xf0] sm:$0xff]
        %v322 = vld [vmem:[%s1 + $0xf8] sm:$0xff]
        %323 = vmatpush.msra.mxu0 %v306
        %324 = vmatpush.msra.mxu0 %v305
        %325 = vmatpush.msra.mxu0 %v304
        %326 = vmatpush.msra.mxu0 %v303
        %327 = vmatpush.msra.mxu0 %v302
        %328 = vmatpush.msra.mxu0 %v301
        %329 = vmatpush.msra.mxu0 %v300
        %330 = vmatpush.msra.mxu0 %v299
        %331 = vmatpush.msra.mxu0 %v298
        %332 = vmatpush.msra.mxu0 %v297
        %333 = vmatpush.msra.mxu0 %v296
        %334 = vmatpush.msra.mxu0 %v295
        %335 = vmatpush.msra.mxu0 %v294
        %336 = vmatpush.msra.mxu0 %v293
        %337 = vmatpush.msra.mxu0 %v292
        %338 = vmatpush.msra.mxu0 %v291
        %339 = vmatmul.f32.gmra.mxu0 %v283
        %v340 = vpop.f32.mrf.mxu0
        %v341 = vadd.f32 0.0, %v340
        %342 = vmatmul.f32.gmra.mxu0 %v285
        %v343 = vpop.f32.mrf.mxu0
        %v344 = vadd.f32 0.0, %v343
        %345 = vmatmul.f32.gmra.mxu0 %v287
        %v346 = vpop.f32.mrf.mxu0
        %v347 = vadd.f32 0.0, %v346
        %348 = vmatmul.f32.gmra.mxu0 %v289
        %v349 = vpop.f32.mrf.mxu0
        %v350 = vadd.f32 0.0, %v349
        %351 = vdwg.mxu0
        %352 = vmatpush.msra.mxu0 %v322
        %353 = vmatpush.msra.mxu0 %v321
        %354 = vmatpush.msra.mxu0 %v320
        %355 = vmatpush.msra.mxu0 %v319
        %356 = vmatpush.msra.mxu0 %v318
        %357 = vmatpush.msra.mxu0 %v317
        %358 = vmatpush.msra.mxu0 %v316
        %359 = vmatpush.msra.mxu0 %v315
        %360 = vmatpush.msra.mxu0 %v314
        %361 = vmatpush.msra.mxu0 %v313
        %362 = vmatpush.msra.mxu0 %v312
        %363 = vmatpush.msra.mxu0 %v311
        %364 = vmatpush.msra.mxu0 %v310
        %365 = vmatpush.msra.mxu0 %v309
        %366 = vmatpush.msra.mxu0 %v308
        %367 = vmatpush.msra.mxu0 %v307
        %368 = vmatmul.f32.gmra.mxu0 %v284
        %v369 = vpop.f32.mrf.mxu0
        %v370 = vadd.f32 %v341, %v369
        %371 = vmatmul.f32.gmra.mxu0 %v286
        %v372 = vpop.f32.mrf.mxu0
        %v373 = vadd.f32 %v344, %v372
        %374 = vmatmul.f32.gmra.mxu0 %v288
        %v375 = vpop.f32.mrf.mxu0
        %v376 = vadd.f32 %v347, %v375
        %377 = vmatmul.f32.gmra.mxu0 %v290
        %v378 = vpop.f32.mrf.mxu0
        %v379 = vadd.f32 %v350, %v378
        %380 = vdwg.mxu0
        %v381 = vld [vmem:[%s4] sm:$0xff]
        %v382 = vld [vmem:[%s5] sm:$0xff]
        %384 = vset.pattern.permute.xlu0 0
        %385 = vperm.xlu0 %384, %v382
        %v386 = vpop.permute.xlu0 %385
        %vm388 = vcmask 261120
        %v390 = vsel %vm388, %v381, 0
        %392 = vmatpush.msra.mxu0 0.0
        %393 = vmatpush.msra.mxu0 0.0
        %394 = vmatpush.msra.mxu0 0.0
        %395 = vmatpush.msra.mxu0 0.0
        %396 = vmatpush.msra.mxu0 0.0
        %397 = vmatpush.msra.mxu0 0.0
        %398 = vmatpush.msra.mxu0 0.0
        %399 = vmatpush.msra.mxu0 0.0
        %400 = vmatpush.msra.mxu0 0.0
        %401 = vmatpush.msra.mxu0 0.0
        %402 = vmatpush.msra.mxu0 0.0
        %403 = vmatpush.msra.mxu0 0.0
        %404 = vmatpush.msra.mxu0 %v379
        %405 = vmatpush.msra.mxu0 %v376
        %406 = vmatpush.msra.mxu0 %v373
        %407 = vmatpush.msra.mxu0 %v370
        %408 = vmatmul.f32.gmra.mxu0 %v390
        %v409 = vpop.f32.mrf.mxu0
        %v410 = vadd.f32 %v386, %v409
        %411 = vdwg.mxu0
        %v412 = vadd.f32 %v410, 3.0
        %v413 = vmax.f32 %v412, 0.0
        %v414 = vmin.f32 %v413, 6.0
        %v415 = vmul.f32 %v414, 0.16666667
        %v416 = vmul.f32 %v410, %v415
        %v417 = vld [vmem:[%s6] sm:$0xff]
        %v418 = vld [vmem:[%s6 + $0x8] sm:$0xff]
        %v419 = vld [vmem:[%s6 + $0x10] sm:$0xff]
        %v420 = vld [vmem:[%s6 + $0x18] sm:$0xff]
        %vm421 = vcmask 64512
        %v423 = vsel %vm421, %v417, 0
        %v426 = vsel %vm421, %v418, 0
        %v429 = vsel %vm421, %v419, 0
        %v432 = vsel %vm421, %v420, 0
        %434 = vmatpush.msra.mxu0 0.0
        %435 = vmatpush.msra.mxu0 0.0
        %436 = vmatpush.msra.mxu0 0.0
        %437 = vmatpush.msra.mxu0 0.0
        %438 = vmatpush.msra.mxu0 0.0
        %439 = vmatpush.msra.mxu0 0.0
        %440 = vmatpush.msra.mxu0 0.0
        %441 = vmatpush.msra.mxu0 0.0
        %442 = vmatpush.msra.mxu0 0.0
        %443 = vmatpush.msra.mxu0 0.0
        %444 = vmatpush.msra.mxu0 0.0
        %445 = vmatpush.msra.mxu0 0.0
        %446 = vmatpush.msra.mxu0 0.0
        %447 = vmatpush.msra.mxu0 0.0
        %448 = vmatpush.msra.mxu0 0.0
        %449 = vmatpush.msra.mxu0 %v416
        %450 = vmatmul.f32.gmra.mxu0 %v423
        %v451 = vpop.f32.mrf.mxu0
        %v452 = vadd.f32 0.0, %v451
        %453 = vmatmul.f32.gmra.mxu0 %v426
        %v454 = vpop.f32.mrf.mxu0
        %v455 = vadd.f32 0.0, %v454
        %456 = vmatmul.f32.gmra.mxu0 %v429
        %v457 = vpop.f32.mrf.mxu0
        %v458 = vadd.f32 0.0, %v457
        %459 = vmatmul.f32.gmra.mxu0 %v432
        %v460 = vpop.f32.mrf.mxu0
        %v461 = vadd.f32 0.0, %v460
        %462 = vdwg.mxu0
        %v463 = vxor.u32 %v452, 2147483648
        %v464 = vxor.u32 %v455, 2147483648
        %v465 = vxor.u32 %v458, 2147483648
        %v466 = vxor.u32 %v461, 2147483648
        %v467 = vmul.f32 %v463, 1.442695
        %v468 = vpow.pop %v467
        %v469 = vmul.f32 %v464, 1.442695
        %v470 = vpow.pop %v469
        %v471 = vmul.f32 %v465, 1.442695
        %v472 = vpow.pop %v471
        %v473 = vmul.f32 %v466, 1.442695
        %v474 = vpow.pop %v473
        %v475 = vadd.f32 %v468, 1.0
        %v476 = vadd.f32 %v470, 1.0
        %v477 = vadd.f32 %v472, 1.0
        %v478 = vadd.f32 %v474, 1.0
        %v479 = vrcp.pop %v475
        %v480 = vmul.f32 %v475, %v479
        %v481 = vsub.f32 1.0, %v480
        %v482 = vmul.f32 %v479, %v481
        %v483 = vadd.f32 %v479, %v482
        %vm484 = vweird.f32 %v475
        %vm485 = vweird.f32 %v479
        %vm486 = vmor %vm484, %vm485
        %v487 = vsel %vm486, %v479, %v483
        %v488 = vand.u32 2147483647, %v475
        %vm489 = vcmp.eq.f32.partialorder %v488, 8.507059e+37
        %v490 = vand.u32 %v475, 2147483648
        %v491 = vor.u32 1.1754944e-38, %v490
        %v492 = vsel %vm489, %v491, %v487
        %v493 = vmul.f32 1.0, %v492
        %v494 = vrcp.pop %v476
        %v495 = vmul.f32 %v476, %v494
        %v496 = vsub.f32 1.0, %v495
        %v497 = vmul.f32 %v494, %v496
        %v498 = vadd.f32 %v494, %v497
        %vm499 = vweird.f32 %v476
        %vm500 = vweird.f32 %v494
        %vm501 = vmor %vm499, %vm500
        %v502 = vsel %vm501, %v494, %v498
        %v503 = vand.u32 2147483647, %v476
        %vm504 = vcmp.eq.f32.partialorder %v503, 8.507059e+37
        %v505 = vand.u32 %v476, 2147483648
        %v506 = vor.u32 1.1754944e-38, %v505
        %v507 = vsel %vm504, %v506, %v502
        %v508 = vmul.f32 1.0, %v507
        %v509 = vrcp.pop %v477
        %v510 = vmul.f32 %v477, %v509
        %v511 = vsub.f32 1.0, %v510
        %v512 = vmul.f32 %v509, %v511
        %v513 = vadd.f32 %v509, %v512
        %vm514 = vweird.f32 %v477
        %vm515 = vweird.f32 %v509
        %vm516 = vmor %vm514, %vm515
        %v517 = vsel %vm516, %v509, %v513
        %v518 = vand.u32 2147483647, %v477
        %vm519 = vcmp.eq.f32.partialorder %v518, 8.507059e+37
        %v520 = vand.u32 %v477, 2147483648
        %v521 = vor.u32 1.1754944e-38, %v520
        %v522 = vsel %vm519, %v521, %v517
        %v523 = vmul.f32 1.0, %v522
        %v524 = vrcp.pop %v478
        %v525 = vmul.f32 %v478, %v524
        %v526 = vsub.f32 1.0, %v525
        %v527 = vmul.f32 %v524, %v526
        %v528 = vadd.f32 %v524, %v527
        %vm529 = vweird.f32 %v478
        %vm530 = vweird.f32 %v524
        %vm531 = vmor %vm529, %vm530
        %v532 = vsel %vm531, %v524, %v528
        %v533 = vand.u32 2147483647, %v478
        %vm534 = vcmp.eq.f32.partialorder %v533, 8.507059e+37
        %v535 = vand.u32 %v478, 2147483648
        %v536 = vor.u32 1.1754944e-38, %v535
        %v537 = vsel %vm534, %v536, %v532
        %v538 = vmul.f32 1.0, %v537
        %v539 = vld [vmem:[%s2] sm:$0xff]
        %v540 = vld [vmem:[%s2 + $0x8] sm:$0xff]
        %v541 = vld [vmem:[%s2 + $0x10] sm:$0xff]
        %v542 = vld [vmem:[%s2 + $0x18] sm:$0xff]
        %v543 = vld [vmem:[%s2 + $0x20] sm:$0xff]
        %v544 = vld [vmem:[%s2 + $0x28] sm:$0xff]
        %v545 = vld [vmem:[%s2 + $0x30] sm:$0xff]
        %v546 = vld [vmem:[%s2 + $0x38] sm:$0xff]
        %v548 = vsel %vm388, %v493, 0
        %v551 = vsel %vm388, %v508, 0
        %v554 = vsel %vm388, %v523, 0
        %v557 = vsel %vm388, %v538, 0
        %559 = vmatpush.msra.mxu0 0.0
        %560 = vmatpush.msra.mxu0 0.0
        %561 = vmatpush.msra.mxu0 0.0
        %562 = vmatpush.msra.mxu0 0.0
        %563 = vmatpush.msra.mxu0 0.0
        %564 = vmatpush.msra.mxu0 0.0
        %565 = vmatpush.msra.mxu0 0.0
        %566 = vmatpush.msra.mxu0 0.0
        %567 = vmatpush.msra.mxu0 0.0
        %568 = vmatpush.msra.mxu0 0.0
        %569 = vmatpush.msra.mxu0 0.0
        %570 = vmatpush.msra.mxu0 0.0
        %571 = vmatpush.msra.mxu0 %v545
        %572 = vmatpush.msra.mxu0 %v543
        %573 = vmatpush.msra.mxu0 %v541
        %574 = vmatpush.msra.mxu0 %v539
        %575 = vmatmul.f32.gmra.mxu0 %v548
        %v576 = vpop.f32.mrf.mxu0
        %v577 = vadd.f32 0.0, %v576
        %578 = vmatmul.f32.gmra.mxu0 %v551
        %v579 = vpop.f32.mrf.mxu0
        %v580 = vadd.f32 0.0, %v579
        %581 = vmatmul.f32.gmra.mxu0 %v554
        %v582 = vpop.f32.mrf.mxu0
        %v583 = vadd.f32 0.0, %v582
        %584 = vmatmul.f32.gmra.mxu0 %v557
        %v585 = vpop.f32.mrf.mxu0
        %v586 = vadd.f32 0.0, %v585
        %587 = vdwg.mxu0
        %588 = vmatpush.msra.mxu0 0.0
        %589 = vmatpush.msra.mxu0 0.0
        %590 = vmatpush.msra.mxu0 0.0
        %591 = vmatpush.msra.mxu0 0.0
        %592 = vmatpush.msra.mxu0 0.0
        %593 = vmatpush.msra.mxu0 0.0
        %594 = vmatpush.msra.mxu0 0.0
        %595 = vmatpush.msra.mxu0 0.0
        %596 = vmatpush.msra.mxu0 0.0
        %597 = vmatpush.msra.mxu0 0.0
        %598 = vmatpush.msra.mxu0 0.0
        %599 = vmatpush.msra.mxu0 0.0
        %600 = vmatpush.msra.mxu0 %v546
        %601 = vmatpush.msra.mxu0 %v544
        %602 = vmatpush.msra.mxu0 %v542
        %603 = vmatpush.msra.mxu0 %v540
        %604 = vmatmul.f32.gmra.mxu0 %v548
        %v605 = vpop.f32.mrf.mxu0
        %v606 = vadd.f32 0.0, %v605
        %607 = vmatmul.f32.gmra.mxu0 %v551
        %v608 = vpop.f32.mrf.mxu0
        %v609 = vadd.f32 0.0, %v608
        %610 = vmatmul.f32.gmra.mxu0 %v554
        %v611 = vpop.f32.mrf.mxu0
        %v612 = vadd.f32 0.0, %v611
        %613 = vmatmul.f32.gmra.mxu0 %v557
        %v614 = vpop.f32.mrf.mxu0
        %v615 = vadd.f32 0.0, %v614
        %616 = vdwg.mxu0
        %v617 = vld [vmem:[%s3] sm:$0xff]
        %v618 = vld [vmem:[%s3 + $0x8] sm:$0xff]
        %v619 = vld [vmem:[%s3 + $0x10] sm:$0xff]
        %v620 = vld [vmem:[%s3 + $0x18] sm:$0xff]
        %v621 = vld [vmem:[%s3 + $0x20] sm:$0xff]
        %v622 = vld [vmem:[%s3 + $0x28] sm:$0xff]
        %v623 = vld [vmem:[%s3 + $0x30] sm:$0xff]
        %v624 = vld [vmem:[%s3 + $0x38] sm:$0xff]
        %625 = vmatpush.msra.mxu0 0.0
        %626 = vmatpush.msra.mxu0 0.0
        %627 = vmatpush.msra.mxu0 0.0
        %628 = vmatpush.msra.mxu0 0.0
        %629 = vmatpush.msra.mxu0 0.0
        %630 = vmatpush.msra.mxu0 0.0
        %631 = vmatpush.msra.mxu0 0.0
        %632 = vmatpush.msra.mxu0 0.0
        %633 = vmatpush.msra.mxu0 0.0
        %634 = vmatpush.msra.mxu0 0.0
        %635 = vmatpush.msra.mxu0 0.0
        %636 = vmatpush.msra.mxu0 0.0
        %637 = vmatpush.msra.mxu0 %v623
        %638 = vmatpush.msra.mxu0 %v621
        %639 = vmatpush.msra.mxu0 %v619
        %640 = vmatpush.msra.mxu0 %v617
        %641 = vmatmul.f32.gmra.mxu0 %v548
        %v642 = vpop.f32.mrf.mxu0
        %v643 = vadd.f32 0.0, %v642
        %644 = vmatmul.f32.gmra.mxu0 %v551
        %v645 = vpop.f32.mrf.mxu0
        %v646 = vadd.f32 0.0, %v645
        %647 = vmatmul.f32.gmra.mxu0 %v554
        %v648 = vpop.f32.mrf.mxu0
        %v649 = vadd.f32 0.0, %v648
        %650 = vmatmul.f32.gmra.mxu0 %v557
        %v651 = vpop.f32.mrf.mxu0
        %v652 = vadd.f32 0.0, %v651
        %653 = vdwg.mxu0
        %654 = vmatpush.msra.mxu0 0.0
        %655 = vmatpush.msra.mxu0 0.0
        %656 = vmatpush.msra.mxu0 0.0
        %657 = vmatpush.msra.mxu0 0.0
        %658 = vmatpush.msra.mxu0 0.0
        %659 = vmatpush.msra.mxu0 0.0
        %660 = vmatpush.msra.mxu0 0.0
        %661 = vmatpush.msra.mxu0 0.0
        %662 = vmatpush.msra.mxu0 0.0
        %663 = vmatpush.msra.mxu0 0.0
        %664 = vmatpush.msra.mxu0 0.0
        %665 = vmatpush.msra.mxu0 0.0
        %666 = vmatpush.msra.mxu0 %v624
        %667 = vmatpush.msra.mxu0 %v622
        %668 = vmatpush.msra.mxu0 %v620
        %669 = vmatpush.msra.mxu0 %v618
        %670 = vmatmul.f32.gmra.mxu0 %v548
        %v671 = vpop.f32.mrf.mxu0
        %v672 = vadd.f32 0.0, %v671
        %673 = vmatmul.f32.gmra.mxu0 %v551
        %v674 = vpop.f32.mrf.mxu0
        %v675 = vadd.f32 0.0, %v674
        %676 = vmatmul.f32.gmra.mxu0 %v554
        %v677 = vpop.f32.mrf.mxu0
        %v678 = vadd.f32 0.0, %v677
        %679 = vmatmul.f32.gmra.mxu0 %v557
        %v680 = vpop.f32.mrf.mxu0
        %v681 = vadd.f32 0.0, %v680
        %682 = vdwg.mxu0
        %v683 = vmul.f32 %v283, %v643
        %v684 = vmul.f32 %v284, %v672
        %v685 = vmul.f32 %v285, %v646
        %v686 = vmul.f32 %v286, %v675
        %v687 = vmul.f32 %v287, %v649
        %v688 = vmul.f32 %v288, %v678
        %v689 = vmul.f32 %v289, %v652
        %v690 = vmul.f32 %v290, %v681
        %v691 = vmul.f32 %v683, %v577
        %v692 = vmul.f32 %v684, %v606
        %v693 = vmul.f32 %v685, %v580
        %v694 = vmul.f32 %v686, %v609
        %v695 = vmul.f32 %v687, %v583
        %v696 = vmul.f32 %v688, %v612
        %v697 = vmul.f32 %v689, %v586
        %v698 = vmul.f32 %v690, %v615
        %699 = vst [vmem:[%s274] sm:$0xff] %v691
        %700 = vst [vmem:[%s274 + $0x8] sm:$0xff] %v692
        %701 = vst [vmem:[%s274 + $0x10] sm:$0xff] %v693
        %702 = vst [vmem:[%s274 + $0x18] sm:$0xff] %v694
        %703 = vst [vmem:[%s274 + $0x20] sm:$0xff] %v695
        %704 = vst [vmem:[%s274 + $0x28] sm:$0xff] %v696
        %705 = vst [vmem:[%s274 + $0x30] sm:$0xff] %v697
        %706 = vst [vmem:[%s274 + $0x38] sm:$0xff] %v698
        %s707 = sand.u32 %s181, 1
        %s708 = scalar_lea.sflag [#allocation3], %s707
        %s709 = sand.u32 %s181, 1
        %s710 = smul.addr %s709, 64
        %s711 = scalar_lea.vmem [#allocation2], %s710
        // Predicated region
        $region49: #{tpu_custom_call.1} parent=47 // pred_check
          %p712 = pneg %p191
        $region50: #{tpu_custom_call.1} parent=47 // pred_check_branch
          %714 = sbr.rel (%p712) target = $region52
        $region51: #{tpu_custom_call.1} parent=47 // pred_region
          %s715 = smul.u32 4, %s21
          %717 = vsyncadd %s708, 0
          %s718 = smul.addr %s715, 2
          %s719 = smul.addr %s718, 8
          %s720 = scalar_lea.hbm %s7, %s719
          %s721 = sshll.u32 %s711, 4
          %s722 = int_to_ptr.vmem [resolvable:$true] %s721
          %s723 = sshll.u32 %s720, 4
          %s724 = int_to_ptr.hbm [resolvable:$true] %s723
          %729 = dma.vmem_to_hbm [thread:$0]  %s722, 1024, %s724, %s708, 256, 256, 16
        $region52: #{tpu_custom_call.1} parent=47 // pred_fallthru
          _
      $region48: #{tpu_custom_call.1} parent=5 // pred_fallthru
        _
      %p730 = scmp.le.s32.totalorder 2, %s16
      // Predicated region
      $region53: #{tpu_custom_call.1} parent=5 // pred_check
        %p731 = pneg %p730
      $region54: #{tpu_custom_call.1} parent=5 // pred_check_branch
        %733 = sbr.rel (%p731) target = $region56
      $region55: #{tpu_custom_call.1} parent=5 // pred_region
        %s734 = ssub.s32 %s16, 2
        // Predicated region
        $region57: #{tpu_custom_call.1} parent=55 // pred_check
          %p735 = pneg %p197
        $region58: #{tpu_custom_call.1} parent=55 // pred_check_branch
          %737 = sbr.rel (%p735) target = $region60
        $region59: #{tpu_custom_call.1} parent=55 // pred_region
          %s738 = sand.u32 %s182, 1
          %s739 = scalar_lea.sflag [#allocation3], %s738
          %s740 = sand.u32 %s182, 1
          %s741 = smul.addr %s740, 64
          %s742 = scalar_lea.vmem [#allocation2], %s741
          %744 = dma.done %s739, 1024
        $region60: #{tpu_custom_call.1} parent=55 // pred_fallthru
          _
      $region56: #{tpu_custom_call.1} parent=5 // pred_fallthru
        _
    $region6: #{tpu_custom_call.1} parent=1 // loop_footer
      %s20 = sadd.s32 1, %s16
    $region7: #{tpu_custom_call.1} parent=1 // loop_footer_branch
      %15 = sbr.rel target = $region3
    $region8: #{tpu_custom_call.1} parent=1 // loop_exit
      _
    %745 = vsyncpa [#allocation3], 1
    %s746 = scalar_lea.sflag [#allocation3], 1
    %747 = vsyncpa %s746, 1

</llo_original>
